<compile_context>
chip_gen: v6e
topology: v6e:2x2x1
jax: 0.10.0
libtpu: 0.0.40
codegen_flags: <defaults>
</compile_context>

<pallas_src>
import math

import jax
import jax.numpy as jnp
from jax import lax
from jax.experimental import pallas as pl
from jax.experimental.pallas import tpu as pltpu

BCE_WEIGHT = 0.2
DICE_WEIGHT = 0.8
DICE_SMOOTH = 1e-6
LOG_CLAMP = -100.0  # torch.nn.BCELoss clamps log(p) at -100

_LANE = 128
_SUB = 8


def _make_kernel(tile_rows, chunk, rows, full_blocks, edge_possible):
    """Build the streaming-reduction kernel for a fixed static configuration."""
    n_chunks = tile_rows // chunk
    unroll = n_chunks if n_chunks < 8 else 8

    def kernel(p_ref, t_ref, bce_acc, inter_acc, pt_acc):
        s = pl.program_id(1)  # reduction axis (last grid dim)

        @pl.when(s == 0)
        def _init():
            bce_acc[...] = jnp.zeros_like(bce_acc)
            inter_acc[...] = jnp.zeros_like(inter_acc)
            pt_acc[...] = jnp.zeros_like(pt_acc)

        # Global tile index (core-major): which tile of the row range this is.
        g = pl.program_id(0) * pl.num_programs(1) + s

        def fold(x):
            # (chunk, 128) -> (chunk//8, 8, 128); pure vreg-wise VPU adds,
            # no cross-lane (XLU) reduction inside the hot loop.
            return jnp.sum(x.reshape(-1, _SUB, _LANE), axis=0)

        def accumulate(masked):
            def body(i, carry):
                bce_a, int_a, pt_a = carry
                r0 = pl.multiple_of(i * chunk, chunk)
                p = p_ref[pl.ds(r0, chunk), :].astype(jnp.float32)
                t = t_ref[pl.ds(r0, chunk), :].astype(jnp.float32)
                if masked:
                    rid = (g * tile_rows + r0
                           + lax.broadcasted_iota(jnp.int32, (chunk, _LANE), 0))
                    valid = rid < rows
                    # p=0, t=0 contributes exactly 0 to all three partials
                    # (the BCE term is 0 after the -100 log clamp).
                    p = jnp.where(valid, p, 0.0)
                    t = jnp.where(valid, t, 0.0)
                log_p = jnp.maximum(jnp.log(p), LOG_CLAMP)
                log_1mp = jnp.maximum(jnp.log(1.0 - p), LOG_CLAMP)
                # Positive log-likelihood; negated once in the wrapper finalize.
                ll = t * (log_p - log_1mp) + log_1mp
                return (bce_a + fold(ll),
                        int_a + fold(p * t),
                        pt_a + fold(p + t))

            zero = jnp.zeros((_SUB, _LANE), jnp.float32)
            bce_a, int_a, pt_a = lax.fori_loop(
                0, n_chunks, body, (zero, zero, zero), unroll=unroll)
            # Single read-modify-write of each resident accumulator per step.
            bce_acc[...] += bce_a
            inter_acc[...] += int_a
            pt_acc[...] += pt_a

        if edge_possible:
            @pl.when(g < full_blocks)
            def _full():
                accumulate(masked=False)

            @pl.when(g >= full_blocks)
            def _edge():
                accumulate(masked=True)
        else:
            accumulate(masked=False)

    return kernel


def combined_loss(predictions, targets, *, max_tile_rows=2048, num_cores=2):
    """0.2 * BCELoss(pred, tgt) + 0.8 * DiceLoss(pred, tgt), both reductions over
    the flattened tensors (matches the PyTorch CombinedLoss module).

    Inputs stream in their native dtype (e.g. bf16 targets halve HBM traffic);
    predictions must lie in [0, 1] (same contract as torch.nn.BCELoss).
    """
    assert predictions.shape == targets.shape
    total_n = math.prod(predictions.shape)

    p_flat = predictions.reshape(-1)
    t_flat = targets.reshape(-1)

    rem = total_n % _LANE
    if rem:
        # Only materialization in the pipeline, and only when numel % 128 != 0:
        # pad to the next lane boundary (zero padding is exact, see kernel).
        pad = _LANE - rem
        p_flat = jnp.pad(p_flat, (0, pad))
        t_flat = jnp.pad(t_flat, (0, pad))

    rows = p_flat.shape[0] // _LANE
    p2d = p_flat.reshape(rows, _LANE)  # free (metadata only) when rem == 0
    t2d = t_flat.reshape(rows, _LANE)

    # Tile rows: big enough to amortize the ~0.35us/step overhead, rounded to a
    # multiple of 8 to satisfy the (8,128) block constraint, clamped for small
    # inputs.  2048x128xf32 x 2 inputs x 2 buffers = 4 MiB double-buffered.
    tile_rows = min(max_tile_rows, -(-rows // _SUB) * _SUB)
    chunk = 32 if tile_rows % 32 == 0 else (16 if tile_rows % 16 == 0 else _SUB)

    steps_total = -(-rows // tile_rows)
    # Split the row range across TensorCores only when there is enough work.
    n_par = num_cores if (num_cores > 1 and steps_total >= 2 * num_cores) else 1
    steps = -(-steps_total // n_par)
    full_blocks = rows // tile_rows                      # fully-valid tiles
    edge_possible = (rows % tile_rows != 0) or (n_par * steps != steps_total)

    def in_index(c, s):
        # Clamp so over-coverage tiles (global index >= steps_total) re-read the
        # last valid tile; they are fully masked in-kernel and contribute zero.
        return (jnp.minimum(c * steps + s, steps_total - 1), 0)

    in_spec = pl.BlockSpec((tile_rows, _LANE), in_index)
    acc_spec = pl.BlockSpec((_SUB, _LANE), lambda c, s: (c, 0))
    acc_shape = jax.ShapeDtypeStruct((n_par * _SUB, _LANE), jnp.float32)

    kernel = _make_kernel(tile_rows, chunk, rows, full_blocks, edge_possible)

    ll_part, inter_part, pt_part = pl.pallas_call(
        kernel,
        out_shape=(acc_shape, acc_shape, acc_shape),
        grid_spec=pltpu.PrefetchScalarGridSpec(
            num_scalar_prefetch=0,
            grid=(n_par, steps),
            in_specs=[in_spec, in_spec],
            out_specs=[acc_spec, acc_spec, acc_spec],
        ),
        compiler_params=pltpu.CompilerParams(
            dimension_semantics=("parallel", "arbitrary"),
            vmem_limit_bytes=32 * 1024 * 1024),
    )(p2d, t2d)

    # Tiny finalize (a few KiB): cross-lane / cross-core reduce + loss formula.
    bce = -jnp.sum(ll_part) / jnp.float32(total_n)
    inter = jnp.sum(inter_part)
    denom = jnp.sum(pt_part) + DICE_SMOOTH
    dice = 1.0 - (2.0 * inter + DICE_SMOOTH) / denom
    return BCE_WEIGHT * bce + DICE_WEIGHT * dice


def _reference(predictions, targets):
    p = predictions.reshape(-1).astype(jnp.float32)
    t = targets.reshape(-1).astype(jnp.float32)
    bce = jnp.mean(-(t * jnp.maximum(jnp.log(p), LOG_CLAMP)
                     + (1.0 - t) * jnp.maximum(jnp.log(1.0 - p), LOG_CLAMP)))
    inter = jnp.sum(p * t)
    dice = 1.0 - (2.0 * inter + DICE_SMOOTH) / (jnp.sum(p) + jnp.sum(t)
                                                + DICE_SMOOTH)
    return BCE_WEIGHT * bce + DICE_WEIGHT * dice


if __name__ == "__main__":
    key = jax.random.PRNGKey(0)

    # Primary example: NCHW sigmoid predictions vs. binary mask.
    kp, kt = jax.random.split(key)
    shape = (2, 4, 16, 16)
    preds = jax.nn.sigmoid(jax.random.normal(kp, shape, jnp.float32))
    tgts = (jax.random.uniform(kt, shape) > 0.5).astype(jnp.float32)

    loss = combined_loss(preds, tgts)
    jax.block_until_ready(loss)
    ref = _reference(preds, tgts)
    assert jnp.allclose(loss, ref, rtol=1e-4, atol=1e-6), (loss, ref)

    # Extra shapes:
    #  (3, 5, 37)       -> numel not a multiple of 128 (minimal lane pad path)
    #  (2, 1, 640, 1000) -> multi-step accumulation, partial edge tile masking,
    #                       grid over-coverage, and the 2-core parallel split.
    for extra_shape in [(3, 5, 37), (2, 1, 640, 1000)]:
        kp, kt, key = jax.random.split(key, 3)
        p = jax.nn.sigmoid(jax.random.normal(kp, extra_shape, jnp.float32))
        t = (jax.random.uniform(kt, extra_shape) > 0.5).astype(jnp.float32)
        got = combined_loss(p, t)
        jax.block_until_ready(got)
        want = _reference(p, t)
        assert jnp.allclose(got, want, rtol=1e-4, atol=1e-5), (extra_shape, got, want)

    # Native-dtype streaming: bf16 binary targets (no wrapper-side cast).
    kp, kt, key = jax.random.split(key, 3)
    shape_bf = (4, 4, 64, 64)
    p = jax.nn.sigmoid(jax.random.normal(kp, shape_bf, jnp.float32))
    t = (jax.random.uniform(kt, shape_bf) > 0.5).astype(jnp.bfloat16)
    got = combined_loss(p, t)
    jax.block_until_ready(got)
    want = _reference(p, t)
    assert jnp.allclose(got, want, rtol=1e-4, atol=1e-5), (got, want)

    print("KERNEL_OK")
</pallas_src>

<mosaic_0001>
module attributes {stable_mosaic.version = 11 : i64} {
  func.func @kernel(%arg0: i32, %arg1: i32, %arg2: memref<16x128xf32, #tpu.memory_space<vmem>>, %arg3: memref<16x128xf32, #tpu.memory_space<vmem>>, %arg4: memref<8x128xf32, #tpu.memory_space<vmem>>, %arg5: memref<8x128xf32, #tpu.memory_space<vmem>>, %arg6: memref<8x128xf32, #tpu.memory_space<vmem>>) attributes {dimension_semantics = [#tpu.dimension_semantics<parallel>, #tpu.dimension_semantics<arbitrary>], iteration_bounds = array<i64: 1, 1>, scalar_prefetch = 0 : i64, scratch_operands = 0 : i64, tpu.core_type = #tpu.core_type<tc>, window_params = [{transform_indices = @transform_0, window_bounds = array<i64: 16, 128>}, {transform_indices = @transform_1, window_bounds = array<i64: 16, 128>}, {transform_indices = @transform_2, window_bounds = array<i64: 8, 128>}, {transform_indices = @transform_3, window_bounds = array<i64: 8, 128>}, {transform_indices = @transform_4, window_bounds = array<i64: 8, 128>}]} {
    %c0_i32 = arith.constant 0 : i32
    %0 = arith.cmpi eq, %arg1, %c0_i32 : i32
    %1 = arith.extui %0 : i1 to i32
    %c0_i32_0 = arith.constant 0 : i32
    %2 = arith.cmpi ne, %1, %c0_i32_0 : i32
    scf.if %2 {
      %cst_21 = arith.constant 0.000000e+00 : f32
      %41 = vector.broadcast %cst_21 : f32 to vector<8x128xf32>
      %c0_22 = arith.constant 0 : index
      %c0_23 = arith.constant 0 : index
      %42 = vector.load %arg4[%c0_22, %c0_23] : memref<8x128xf32, #tpu.memory_space<vmem>>, vector<8x128xf32>
      tpu.vector_store %arg4[%c0_22, %c0_23], %41 {strides = array<i32>} : memref<8x128xf32, #tpu.memory_space<vmem>>, vector<8x128xf32>,
      %cst_24 = arith.constant 0.000000e+00 : f32
      %43 = vector.broadcast %cst_24 : f32 to vector<8x128xf32>
      %c0_25 = arith.constant 0 : index
      %c0_26 = arith.constant 0 : index
      %44 = vector.load %arg5[%c0_25, %c0_26] : memref<8x128xf32, #tpu.memory_space<vmem>>, vector<8x128xf32>
      tpu.vector_store %arg5[%c0_25, %c0_26], %43 {strides = array<i32>} : memref<8x128xf32, #tpu.memory_space<vmem>>, vector<8x128xf32>,
      %cst_27 = arith.constant 0.000000e+00 : f32
      %45 = vector.broadcast %cst_27 : f32 to vector<8x128xf32>
      %c0_28 = arith.constant 0 : index
      %c0_29 = arith.constant 0 : index
      %46 = vector.load %arg6[%c0_28, %c0_29] : memref<8x128xf32, #tpu.memory_space<vmem>>, vector<8x128xf32>
      tpu.vector_store %arg6[%c0_28, %c0_29], %45 {strides = array<i32>} : memref<8x128xf32, #tpu.memory_space<vmem>>, vector<8x128xf32>,
    } else {
    }
    %cst = arith.constant 0.000000e+00 : f32
    %3 = vector.broadcast %cst : f32 to vector<8x128xf32>
    %c0_i32_1 = arith.constant 0 : i32
    %c16_i32 = arith.constant 16 : i32
    %4 = arith.muli %c0_i32_1, %c16_i32 : i32
    %5 = tpu.assume_multiple %4, 16 : i32
    %6 = arith.index_cast %5 : i32 to index
    %c0 = arith.constant 0 : index
    %7 = vector.load %arg2[%6, %c0] : memref<16x128xf32, #tpu.memory_space<vmem>>, vector<16x128xf32>
    %8 = arith.index_cast %5 : i32 to index
    %c0_2 = arith.constant 0 : index
    %9 = vector.load %arg3[%8, %c0_2] : memref<16x128xf32, #tpu.memory_space<vmem>>, vector<16x128xf32>
    %10 = math.log %7 : vector<16x128xf32>
    %cst_3 = arith.constant -1.000000e+02 : f32
    %11 = vector.broadcast %cst_3 : f32 to vector<16x128xf32>
    %12 = arith.maximumf %10, %11 : vector<16x128xf32>
    %cst_4 = arith.constant 1.000000e+00 : f32
    %13 = vector.broadcast %cst_4 : f32 to vector<16x128xf32>
    %14 = arith.subf %13, %7 : vector<16x128xf32>
    %15 = math.log %14 : vector<16x128xf32>
    %cst_5 = arith.constant -1.000000e+02 : f32
    %16 = vector.broadcast %cst_5 : f32 to vector<16x128xf32>
    %17 = arith.maximumf %15, %16 : vector<16x128xf32>
    %18 = arith.subf %12, %17 : vector<16x128xf32>
    %19 = arith.mulf %9, %18 : vector<16x128xf32>
    %20 = arith.addf %19, %17 : vector<16x128xf32>
    %21 = vector.shape_cast %20 : vector<16x128xf32> to vector<2x8x128xf32>
    %cst_6 = arith.constant dense<0.000000e+00> : vector<8x128xf32>
    %22 = vector.multi_reduction <add>, %21, %cst_6 [0] : vector<2x8x128xf32> to vector<8x128xf32>
    %23 = arith.addf %3, %22 : vector<8x128xf32>
    %24 = arith.mulf %7, %9 : vector<16x128xf32>
    %25 = vector.shape_cast %24 : vector<16x128xf32> to vector<2x8x128xf32>
    %cst_7 = arith.constant dense<0.000000e+00> : vector<8x128xf32>
    %26 = vector.multi_reduction <add>, %25, %cst_7 [0] : vector<2x8x128xf32> to vector<8x128xf32>
    %27 = arith.addf %3, %26 : vector<8x128xf32>
    %28 = arith.addf %7, %9 : vector<16x128xf32>
    %29 = vector.shape_cast %28 : vector<16x128xf32> to vector<2x8x128xf32>
    %cst_8 = arith.constant dense<0.000000e+00> : vector<8x128xf32>
    %30 = vector.multi_reduction <add>, %29, %cst_8 [0] : vector<2x8x128xf32> to vector<8x128xf32>
    %31 = arith.addf %3, %30 : vector<8x128xf32>
    %c1_i32 = arith.constant 1 : i32
    %c0_9 = arith.constant 0 : index
    %c0_10 = arith.constant 0 : index
    %32 = vector.load %arg4[%c0_9, %c0_10] : memref<8x128xf32, #tpu.memory_space<vmem>>, vector<8x128xf32>
    %33 = arith.addf %32, %23 : vector<8x128xf32>
    %c0_11 = arith.constant 0 : index
    %c0_12 = arith.constant 0 : index
    %34 = vector.load %arg4[%c0_11, %c0_12] : memref<8x128xf32, #tpu.memory_space<vmem>>, vector<8x128xf32>
    tpu.vector_store %arg4[%c0_11, %c0_12], %33 {strides = array<i32>} : memref<8x128xf32, #tpu.memory_space<vmem>>, vector<8x128xf32>,
    %c0_13 = arith.constant 0 : index
    %c0_14 = arith.constant 0 : index
    %35 = vector.load %arg5[%c0_13, %c0_14] : memref<8x128xf32, #tpu.memory_space<vmem>>, vector<8x128xf32>
    %36 = arith.addf %35, %27 : vector<8x128xf32>
    %c0_15 = arith.constant 0 : index
    %c0_16 = arith.constant 0 : index
    %37 = vector.load %arg5[%c0_15, %c0_16] : memref<8x128xf32, #tpu.memory_space<vmem>>, vector<8x128xf32>
    tpu.vector_store %arg5[%c0_15, %c0_16], %36 {strides = array<i32>} : memref<8x128xf32, #tpu.memory_space<vmem>>, vector<8x128xf32>,
    %c0_17 = arith.constant 0 : index
    %c0_18 = arith.constant 0 : index
    %38 = vector.load %arg6[%c0_17, %c0_18] : memref<8x128xf32, #tpu.memory_space<vmem>>, vector<8x128xf32>
    %39 = arith.addf %38, %31 : vector<8x128xf32>
    %c0_19 = arith.constant 0 : index
    %c0_20 = arith.constant 0 : index
    %40 = vector.load %arg6[%c0_19, %c0_20] : memref<8x128xf32, #tpu.memory_space<vmem>>, vector<8x128xf32>
    tpu.vector_store %arg6[%c0_19, %c0_20], %39 {strides = array<i32>} : memref<8x128xf32, #tpu.memory_space<vmem>>, vector<8x128xf32>,
    return
  }
  func.func @transform_0(%arg0: i32, %arg1: i32) -> (i32, i32) {
    %c1_i32 = arith.constant 1 : i32
    %0 = arith.muli %arg0, %c1_i32 : i32
    %1 = arith.addi %0, %arg1 : i32
    %c0_i32 = arith.constant 0 : i32
    %2 = arith.minsi %1, %c0_i32 : i32
    %c0_i32_0 = arith.constant 0 : i32
    %c0_i32_1 = arith.constant 0 : i32
    return %2, %c0_i32_0 : i32, i32
  }
  func.func @transform_1(%arg0: i32, %arg1: i32) -> (i32, i32) {
    %c1_i32 = arith.constant 1 : i32
    %0 = arith.muli %arg0, %c1_i32 : i32
    %1 = arith.addi %0, %arg1 : i32
    %c0_i32 = arith.constant 0 : i32
    %2 = arith.minsi %1, %c0_i32 : i32
    %c0_i32_0 = arith.constant 0 : i32
    %c0_i32_1 = arith.constant 0 : i32
    return %2, %c0_i32_0 : i32, i32
  }
  func.func @transform_2(%arg0: i32, %arg1: i32) -> (i32, i32) {
    %c0_i32 = arith.constant 0 : i32
    %c0_i32_0 = arith.constant 0 : i32
    return %arg0, %c0_i32 : i32, i32
  }
  func.func @transform_3(%arg0: i32, %arg1: i32) -> (i32, i32) {
    %c0_i32 = arith.constant 0 : i32
    %c0_i32_0 = arith.constant 0 : i32
    return %arg0, %c0_i32 : i32, i32
  }
  func.func @transform_4(%arg0: i32, %arg1: i32) -> (i32, i32) {
    %c0_i32 = arith.constant 0 : i32
    %c0_i32_0 = arith.constant 0 : i32
    return %arg0, %c0_i32 : i32, i32
  }
}

</mosaic_0001>

<llo_original>
// kernel: tpu_custom_call.1
$region0: #{tpu_custom_call.1}
  #allocation0 [shape = 'u32[]', space=smem, size = 0x4, offset = 0x4, fixed_abs, tag = 'smem constant byte address 0x4 - core index']
  #allocation1 [shape = 'u32[144,128]{1,0:T(1,128)}', space=vmem, size = 0x12000, scoped, tag = 'internal scratch']
  %s0 = inlined_call_operand.hbm [shape: f32[16,128], index: 0, kind: input, shape index: {}]
  %s1 = inlined_call_operand.hbm [shape: f32[16,128], index: 1, kind: input, shape index: {}]
  %s2 = inlined_call_operand.hbm [shape: f32[8,128], index: 2, kind: output, shape index: {0}]
  %s3 = inlined_call_operand.hbm [shape: f32[8,128], index: 3, kind: output, shape index: {1}]
  %s4 = inlined_call_operand.hbm [shape: f32[8,128], index: 4, kind: output, shape index: {2}]
  %5 = xla_tuple %s2, %s3, %s4
  %s6 = sld [smem:[#allocation0]]
  $region46: #{tpu_custom_call.1} parent=0
    _
  %s8 = ssub.s32 1, %s6
  %s9 = scalar_select 0, %s8, %s6
  $region1: #{tpu_custom_call.1} parent=0
    #allocation2 [shape = 'u8[8192]{0}', space=vmem, size = 0x2000, scoped, tag = 'input window, operand 0, single buffered']
    #allocation3 [shape = 's32[1]{0}', space=sflag, size = 0x4, scoped, tag = 'scoped memory for tpu_custom_call.1']
    #allocation4 [shape = 's32[1]{0}', space=sflag, size = 0x4, scoped, tag = 'scoped memory for tpu_custom_call.1']
    #allocation5 [shape = 'u8[8192]{0}', space=vmem, size = 0x2000, scoped, tag = 'input window, operand 1, single buffered']
    #allocation6 [shape = 's32[1]{0}', space=sflag, size = 0x4, scoped, tag = 'scoped memory for tpu_custom_call.1']
    #allocation7 [shape = 'u8[4096]{0}', space=vmem, size = 0x1000, scoped, tag = 'output window, operand 0, single buffered']
    #allocation8 [shape = 'u8[4096]{0}', space=vmem, size = 0x1000, scoped, tag = 'output window, operand 1, single buffered']
    #allocation9 [shape = 's32[1]{0}', space=sflag, size = 0x4, scoped, tag = 'scoped memory for tpu_custom_call.1']
    #allocation10 [shape = 'u8[4096]{0}', space=vmem, size = 0x1000, scoped, tag = 'output window, operand 2, single buffered']
    %10 = vsyncpa [#allocation3], 0
    %11 = vsyncpa [#allocation6], 0
    %12 = vsyncpa [#allocation4], 0
    %13 = vsyncpa [#allocation9], 0
    // Predicated region
    $region2: #{tpu_custom_call.1} parent=1 // pred_check
      _
    $region3: #{tpu_custom_call.1} parent=1 // pred_check_branch
      %15 = sbr.rel (0) target = $region5
    $region4: #{tpu_custom_call.1} parent=1 // pred_region
      %s16 = sadd.s32 0, 0
      %p17 = scmp.lt.s32.totalorder %s16, 0
      %s18 = scalar_select %p17, %s16, 0
      %s19 = smul.u32 2, %s18
      %s21 = ssub.s32 256, 256
      %22 = vsyncadd [#allocation3], %s21
      %s23 = smul.addr %s19, 128
      %s24 = scalar_lea.hbm %s0, %s23
      %s25 = sshll.u32 [#allocation2], 4
      %s26 = int_to_ptr.vmem [resolvable:$true] %s25
      %31 = dma.hbm_to_vmem [thread:$0]  %s24, 256, %s26, [#allocation3], 128, 128, 8
    $region5: #{tpu_custom_call.1} parent=1 // pred_fallthru
      _
    // Predicated region
    $region6: #{tpu_custom_call.1} parent=1 // pred_check
      _
    $region7: #{tpu_custom_call.1} parent=1 // pred_check_branch
      %33 = sbr.rel (0) target = $region9
    $region8: #{tpu_custom_call.1} parent=1 // pred_region
      %s34 = sadd.s32 0, 0
      %p35 = scmp.lt.s32.totalorder %s34, 0
      %s36 = scalar_select %p35, %s34, 0
      %s37 = smul.u32 2, %s36
      %s39 = ssub.s32 256, 256
      %40 = vsyncadd [#allocation6], %s39
      %s41 = smul.addr %s37, 128
      %s42 = scalar_lea.hbm %s1, %s41
      %s43 = sshll.u32 [#allocation5], 4
      %s44 = int_to_ptr.vmem [resolvable:$true] %s43
      %49 = dma.hbm_to_vmem [thread:$0]  %s42, 256, %s44, [#allocation6], 128, 128, 8
    $region9: #{tpu_custom_call.1} parent=1 // pred_fallthru
      _
    // Predicated region
    $region10: #{tpu_custom_call.1} parent=1 // pred_check
      _
    $region11: #{tpu_custom_call.1} parent=1 // pred_check_branch
      %51 = sbr.rel (0) target = $region13
    $region12: #{tpu_custom_call.1} parent=1 // pred_region
      %52 = dma.done [#allocation3], 256
    $region13: #{tpu_custom_call.1} parent=1 // pred_fallthru
      _
    // Predicated region
    $region14: #{tpu_custom_call.1} parent=1 // pred_check
      _
    $region15: #{tpu_custom_call.1} parent=1 // pred_check_branch
      %54 = sbr.rel (0) target = $region17
    $region16: #{tpu_custom_call.1} parent=1 // pred_region
      %55 = dma.done [#allocation6], 256
    $region17: #{tpu_custom_call.1} parent=1 // pred_fallthru
      _
    %s56 = sadd.s32 0, 0
    %p57 = scmp.lt.s32.totalorder %s56, 0
    %s58 = scalar_select %p57, %s56, 0
    %s59 = smul.u32 2, %s58
    %s60 = sadd.s32 0, 0
    %p61 = scmp.lt.s32.totalorder %s60, 0
    %s62 = scalar_select %p61, %s60, 0
    %s63 = smul.u32 2, %s62
    %p64 = scmp.eq.s32.totalorder 0, 0
    // Predicated region
    $region18: #{tpu_custom_call.1} parent=1 // pred_check
      %p65 = pneg %p64
    $region19: #{tpu_custom_call.1} parent=1 // pred_check_branch
      %67 = sbr.rel (%p65) target = $region21
    $region20: #{tpu_custom_call.1} parent=1 // pred_region
      %68 = vst [vmem:[#allocation7] sm:$0xff] 0.0
      %69 = vst [vmem:[#allocation8] sm:$0xff] 0.0
      %70 = vst [vmem:[#allocation10] sm:$0xff] 0.0
    $region21: #{tpu_custom_call.1} parent=1 // pred_fallthru
      _
    %v71 = vld [vmem:[#allocation2] sm:$0xff]
    %v72 = vld [vmem:[#allocation2 + $0x8] sm:$0xff]
    %v73 = vld [vmem:[#allocation5] sm:$0xff]
    %v74 = vld [vmem:[#allocation5 + $0x8] sm:$0xff]
    %v75 = vlog2.pop %v71
    %v76 = vmul.f32 %v75, 0.6931472
    %v77 = vlog2.pop %v72
    %v78 = vmul.f32 %v77, 0.6931472
    %v79 = vmax.f32 %v76, -100.0
    %v80 = vmax.f32 %v78, -100.0
    %v81 = vsub.f32 1.0, %v71
    %v82 = vsub.f32 1.0, %v72
    %v83 = vlog2.pop %v81
    %v84 = vmul.f32 %v83, 0.6931472
    %v85 = vlog2.pop %v82
    %v86 = vmul.f32 %v85, 0.6931472
    %v87 = vmax.f32 %v84, -100.0
    %v88 = vmax.f32 %v86, -100.0
    %v89 = vsub.f32 %v79, %v87
    %v90 = vsub.f32 %v80, %v88
    %v91 = vmul.f32 %v73, %v89
    %v92 = vmul.f32 %v74, %v90
    %v93 = vadd.f32 %v91, %v87
    %v94 = vadd.f32 %v92, %v88
    %v95 = vadd.f32 %v93, %v94
    %v96 = vadd.f32 %v95, 0.0
    %v97 = vmul.f32 %v71, %v73
    %v98 = vmul.f32 %v72, %v74
    %v99 = vadd.f32 %v97, %v98
    %v100 = vadd.f32 %v99, 0.0
    %v101 = vadd.f32 %v71, %v73
    %v102 = vadd.f32 %v72, %v74
    %v103 = vadd.f32 %v101, %v102
    %v104 = vadd.f32 %v103, 0.0
    %v105 = vld [vmem:[#allocation7] sm:$0xff]
    %v106 = vadd.f32 %v105, %v96
    %107 = vst [vmem:[#allocation7] sm:$0xff] %v106
    %v108 = vld [vmem:[#allocation8] sm:$0xff]
    %v109 = vadd.f32 %v108, %v100
    %110 = vst [vmem:[#allocation8] sm:$0xff] %v109
    %v111 = vld [vmem:[#allocation10] sm:$0xff]
    %v112 = vadd.f32 %v111, %v104
    %113 = vst [vmem:[#allocation10] sm:$0xff] %v112
    // Predicated region
    $region22: #{tpu_custom_call.1} parent=1 // pred_check
      _
    $region23: #{tpu_custom_call.1} parent=1 // pred_check_branch
      %115 = sbr.rel (0) target = $region25
    $region24: #{tpu_custom_call.1} parent=1 // pred_region
      %s117 = ssub.s32 128, 128
      %118 = vsyncadd [#allocation4], %s117
      %s120 = sshll.u32 [#allocation7], 4
      %s121 = int_to_ptr.vmem [resolvable:$true] %s120
      %123 = dma.vmem_to_hbm [thread:$0]  %s121, 128, %s2, [#allocation4]
    $region25: #{tpu_custom_call.1} parent=1 // pred_fallthru
      _
    // Predicated region
    $region26: #{tpu_custom_call.1} parent=1 // pred_check
      _
    $region27: #{tpu_custom_call.1} parent=1 // pred_check_branch
      %125 = sbr.rel (0) target = $region29
    $region28: #{tpu_custom_call.1} parent=1 // pred_region
      %s127 = ssub.s32 128, 128
      %128 = vsyncadd [#allocation9], %s127
      %s130 = sshll.u32 [#allocation8], 4
      %s131 = int_to_ptr.vmem [resolvable:$true] %s130
      %133 = dma.vmem_to_hbm [thread:$0]  %s131, 128, %s3, [#allocation9]
    $region29: #{tpu_custom_call.1} parent=1 // pred_fallthru
      _
    // Predicated region
    $region30: #{tpu_custom_call.1} parent=1 // pred_check
      _
    $region31: #{tpu_custom_call.1} parent=1 // pred_check_branch
      %135 = sbr.rel (0) target = $region33
    $region32: #{tpu_custom_call.1} parent=1 // pred_region
      %s137 = ssub.s32 128, 128
      %138 = vsyncadd [#allocation9], %s137
      %s140 = sshll.u32 [#allocation10], 4
      %s141 = int_to_ptr.vmem [resolvable:$true] %s140
      %143 = dma.vmem_to_hbm [thread:$0]  %s141, 128, %s4, [#allocation9]
    $region33: #{tpu_custom_call.1} parent=1 // pred_fallthru
      _
    // Predicated region
    $region34: #{tpu_custom_call.1} parent=1 // pred_check
      _
    $region35: #{tpu_custom_call.1} parent=1 // pred_check_branch
      %145 = sbr.rel (0) target = $region37
    $region36: #{tpu_custom_call.1} parent=1 // pred_region
      %146 = dma.done [#allocation4], 128
    $region37: #{tpu_custom_call.1} parent=1 // pred_fallthru
      _
    // Predicated region
    $region38: #{tpu_custom_call.1} parent=1 // pred_check
      _
    $region39: #{tpu_custom_call.1} parent=1 // pred_check_branch
      %148 = sbr.rel (0) target = $region41
    $region40: #{tpu_custom_call.1} parent=1 // pred_region
      %149 = dma.done [#allocation9], 128
    $region41: #{tpu_custom_call.1} parent=1 // pred_fallthru
      _
    // Predicated region
    $region42: #{tpu_custom_call.1} parent=1 // pred_check
      _
    $region43: #{tpu_custom_call.1} parent=1 // pred_check_branch
      %151 = sbr.rel (0) target = $region45
    $region44: #{tpu_custom_call.1} parent=1 // pred_region
      %152 = dma.done [#allocation9], 128
    $region45: #{tpu_custom_call.1} parent=1 // pred_fallthru
      _
    %153 = vsyncpa [#allocation3], 1
    %154 = vsyncpa [#allocation6], 1
    %155 = vsyncpa [#allocation4], 1
    %156 = vsyncpa [#allocation9], 1

</llo_original>
